<compile_context>
chip_gen: v7x
topology: tpu7x:2x2x1
jax: 0.10.0
libtpu: 0.0.40
codegen_flags: <defaults>
</compile_context>

<pallas_src>
import math
import functools

import jax
import jax.numpy as jnp
from jax.experimental import pallas as pl
from jax.experimental.pallas import tpu as pltpu


def _round_up(v, m):
    return ((v + m - 1) // m) * m


def _gcn_kernel(adj_ref, x_ref, h0_ref, w_ref, *rest, alpha, theta, residual):
    # adj_ref : (tile_n, tile_k)  bf16/f32  row x K tile of adjacency
    # x_ref   : (tile_k, Dp)      bf16/f32  K tile of features (contraction operand)
    # h0_ref  : (tile_n, Dp)      f32       row tile of initial residual
    # w_ref   : (Dp, Dp)          bf16/f32  full weight
    # [xr_ref : (tile_n, Dp)      f32       row tile of input, only if residual]
    # out_ref : (tile_n, Dp)      f32       row tile of output
    # acc_ref : (tile_n, Dp)      f32       VMEM accumulator for hi = adj @ x
    if residual:
        xr_ref, out_ref, acc_ref = rest
    else:
        out_ref, acc_ref = rest

    k = pl.program_id(1)

    @pl.when(k == 0)
    def _init():
        acc_ref[...] = jnp.zeros_like(acc_ref)

    # Partial hi = adj_tile @ x_tile  (MXU matmul #1, f32 accumulate in VMEM scratch)
    acc_ref[...] += jnp.dot(adj_ref[...], x_ref[...],
                            preferred_element_type=jnp.float32)

    @pl.when(k == pl.num_programs(1) - 1)
    def _epilogue():
        hi = acc_ref[...]                                         # f32
        support = (1.0 - alpha) * hi + alpha * h0_ref[...].astype(jnp.float32)
        # MXU matmul #2: support @ W (bf16 operands, f32 accumulation)
        sw = jnp.dot(support.astype(w_ref.dtype), w_ref[...],
                     preferred_element_type=jnp.float32)
        out = theta * sw + (1.0 - theta) * support
        if residual:
            out = out + xr_ref[...].astype(jnp.float32)
        out_ref[...] = out.astype(out_ref.dtype)


def graph_convolution(x, adj, h0, weight, lamda, alpha, l, residual=False, *,
                      tile_n=128, tile_k=512, use_bf16_matmul=True):
    """Pallas implementation of GraphConvolution.forward (variant=False)."""
    n, d = x.shape
    assert adj.shape == (n, n)
    assert h0.shape == (n, d)
    assert weight.shape == (d, d)

    theta = math.log(lamda / l + 1.0)

    # Tile sizes: never larger than the (padded) problem; keep (8, 128) alignment.
    tile_n = min(tile_n, _round_up(n, 8))
    tile_k = min(tile_k, _round_up(n, 128))
    dp = _round_up(d, 128)            # lane-dense output last dim
    np_rows = _round_up(n, tile_n)    # padded row count
    np_k = _round_up(n, tile_k)       # padded contraction count

    f_dtype = x.dtype
    mm_dtype = jnp.bfloat16 if use_bf16_matmul else f_dtype

    # Zero-padded operands (padding contributes zeros to every term, so the
    # valid [:n, :d] slab of the output is unchanged).
    adj_p = jnp.zeros((np_rows, np_k), mm_dtype).at[:n, :n].set(adj.astype(mm_dtype))
    x_mat = jnp.zeros((np_k, dp), mm_dtype).at[:n, :d].set(x.astype(mm_dtype))
    h0_p = jnp.zeros((np_rows, dp), f_dtype).at[:n, :d].set(h0)
    w_p = jnp.zeros((dp, dp), mm_dtype).at[:d, :d].set(weight.astype(mm_dtype))

    inputs = [adj_p, x_mat, h0_p, w_p]
    in_specs = [
        pl.BlockSpec((tile_n, tile_k), lambda i, k: (i, k)),   # adj (rows, K) tile
        pl.BlockSpec((tile_k, dp), lambda i, k: (k, 0)),       # x K tile
        pl.BlockSpec((tile_n, dp), lambda i, k: (i, 0)),       # h0 row tile
        pl.BlockSpec((dp, dp), lambda i, k: (0, 0)),           # full W (resident)
    ]
    if residual:
        xr_p = jnp.zeros((np_rows, dp), f_dtype).at[:n, :d].set(x)
        inputs.append(xr_p)
        in_specs.append(pl.BlockSpec((tile_n, dp), lambda i, k: (i, 0)))

    grid = (np_rows // tile_n, np_k // tile_k)

    kernel = functools.partial(
        _gcn_kernel, alpha=float(alpha), theta=float(theta), residual=residual
    )

    # VMEM budget: double-buffered tiles + f32 accumulator scratch, with headroom.
    mm_sz = jnp.dtype(mm_dtype).itemsize
    f_sz = jnp.dtype(f_dtype).itemsize
    vmem_needed = (
        2 * tile_n * tile_k * mm_sz        # adj tiles
        + 2 * tile_k * dp * mm_sz          # x tiles
        + 2 * tile_n * dp * f_sz           # h0 tiles
        + 2 * dp * dp * mm_sz              # W
        + (2 * tile_n * dp * f_sz if residual else 0)
        + 2 * tile_n * dp * f_sz           # out tiles
        + tile_n * dp * 4                  # f32 accumulator
    )
    vmem_limit = int(min(max(2 * vmem_needed, 16 << 20), 96 << 20))

    in_bytes = sum(a.size * a.dtype.itemsize for a in inputs)
    cost = pl.CostEstimate(
        flops=2 * np_rows * np_k * dp + 2 * np_rows * dp * dp,
        transcendentals=0,
        bytes_accessed=in_bytes + np_rows * dp * f_sz,
    )

    out = pl.pallas_call(
        kernel,
        out_shape=jax.ShapeDtypeStruct((np_rows, dp), f_dtype),
        grid_spec=pltpu.PrefetchScalarGridSpec(
            num_scalar_prefetch=0,
            grid=grid,
            in_specs=in_specs,
            out_specs=pl.BlockSpec((tile_n, dp), lambda i, k: (i, 0)),
            scratch_shapes=[pltpu.VMEM((tile_n, dp), jnp.float32)],
        ),
        compiler_params=pltpu.CompilerParams(
            dimension_semantics=("parallel", "arbitrary"),
            vmem_limit_bytes=vmem_limit,
        ),
        cost_estimate=cost,
    )(*inputs)

    return out[:n, :d]


def graph_convolution_ref(x, adj, h0, weight, lamda, alpha, l, residual=False):
    theta = math.log(lamda / l + 1.0)
    hi = adj @ x
    support = (1.0 - alpha) * hi + alpha * h0
    out = theta * (support @ weight) + (1.0 - theta) * support
    if residual:
        out = out + x
    return out


if __name__ == "__main__":
    key = jax.random.PRNGKey(0)
    k_adj, k_x, k_h0, k_w = jax.random.split(key, 4)

    N, D = 64, 128            # nodes, hidden features (in_features == out_features)
    lamda, alpha, l = 0.5, 0.1, 1
    residual = True

    # deterministic synthetic inputs
    adj = jax.random.uniform(k_adj, (N, N), dtype=jnp.float32)
    adj = adj / jnp.sum(adj, axis=1, keepdims=True)   # row-normalized dense "adjacency"
    x = jax.random.normal(k_x, (N, D), dtype=jnp.float32)
    h0 = jax.random.normal(k_h0, (N, D), dtype=jnp.float32)

    # weight init matching reset_parameters: U(-stdv, stdv), stdv = 1/sqrt(out_features)
    stdv = 1.0 / math.sqrt(D)
    weight = jax.random.uniform(k_w, (D, D), dtype=jnp.float32,
                                minval=-stdv, maxval=stdv)

    ref = graph_convolution_ref(x, adj, h0, weight, lamda, alpha, l, residual=residual)

    # 1) f32 matmul path: tight check against the reference.
    out_f32 = graph_convolution(x, adj, h0, weight, lamda, alpha, l,
                                residual=residual, use_bf16_matmul=False)
    out_f32 = jax.block_until_ready(out_f32)
    assert out_f32.shape == (N, D)
    assert jnp.allclose(out_f32, ref, atol=1e-4, rtol=1e-4), \
        "Pallas f32 output mismatch vs reference"

    # 2) bf16-MXU path (default, fast): loose check (bf16 operands, f32 accumulation).
    out_bf16 = graph_convolution(x, adj, h0, weight, lamda, alpha, l,
                                 residual=residual, use_bf16_matmul=True)
    out_bf16 = jax.block_until_ready(out_bf16)
    assert out_bf16.shape == (N, D)
    assert jnp.allclose(out_bf16, ref, atol=2e-2, rtol=2e-2), \
        "Pallas bf16 output mismatch vs reference"

    print("KERNEL_OK")
</pallas_src>

<mosaic_0001>
module attributes {stable_mosaic.version = 11 : i64} {
  func.func @_gcn_kernel(%arg0: i32, %arg1: i32, %arg2: memref<64x128xf32, #tpu.memory_space<vmem>>, %arg3: memref<128x128xf32, #tpu.memory_space<vmem>>, %arg4: memref<64x128xf32, #tpu.memory_space<vmem>>, %arg5: memref<128x128xf32, #tpu.memory_space<vmem>>, %arg6: memref<64x128xf32, #tpu.memory_space<vmem>>, %arg7: memref<64x128xf32, #tpu.memory_space<vmem>>, %arg8: memref<64x128xf32, #tpu.memory_space<vmem>>) attributes {dimension_semantics = [#tpu.dimension_semantics<parallel>, #tpu.dimension_semantics<arbitrary>], iteration_bounds = array<i64: 1, 1>, scalar_prefetch = 0 : i64, scratch_operands = 1 : i64, tpu.core_type = #tpu.core_type<tc>, window_params = [{transform_indices = @transform_0, window_bounds = array<i64: 64, 128>}, {transform_indices = @transform_1, window_bounds = array<i64: 128, 128>}, {transform_indices = @transform_2, window_bounds = array<i64: 64, 128>}, {pipeline_mode = #tpu.pipeline_mode<synchronous>, transform_indices = @transform_3, window_bounds = array<i64: 128, 128>}, {transform_indices = @transform_4, window_bounds = array<i64: 64, 128>}, {transform_indices = @transform_5, window_bounds = array<i64: 64, 128>}]} {
    %c0_i32 = arith.constant 0 : i32
    %0 = arith.cmpi eq, %arg1, %c0_i32 : i32
    %1 = arith.extui %0 : i1 to i32
    %c0_i32_0 = arith.constant 0 : i32
    %2 = arith.cmpi ne, %1, %c0_i32_0 : i32
    scf.if %2 {
      %cst_10 = arith.constant 0.000000e+00 : f32
      %12 = vector.broadcast %cst_10 : f32 to vector<64x128xf32>
      %c0_11 = arith.constant 0 : index
      %c0_12 = arith.constant 0 : index
      %13 = vector.load %arg8[%c0_11, %c0_12] : memref<64x128xf32, #tpu.memory_space<vmem>>, vector<64x128xf32>
      tpu.vector_store %arg8[%c0_11, %c0_12], %12 {strides = array<i32>} : memref<64x128xf32, #tpu.memory_space<vmem>>, vector<64x128xf32>,
    } else {
    }
    %c0 = arith.constant 0 : index
    %c0_1 = arith.constant 0 : index
    %3 = vector.load %arg8[%c0, %c0_1] : memref<64x128xf32, #tpu.memory_space<vmem>>, vector<64x128xf32>
    %c0_2 = arith.constant 0 : index
    %c0_3 = arith.constant 0 : index
    %4 = vector.load %arg2[%c0_2, %c0_3] : memref<64x128xf32, #tpu.memory_space<vmem>>, vector<64x128xf32>
    %c0_4 = arith.constant 0 : index
    %c0_5 = arith.constant 0 : index
    %5 = vector.load %arg3[%c0_4, %c0_5] : memref<128x128xf32, #tpu.memory_space<vmem>>, vector<128x128xf32>
    %cst = arith.constant dense<0.000000e+00> : vector<64x128xf32>
    %6 = tpu.matmul %4, %5, %cst {dimension_numbers = #tpu.dot_dimension_numbers<[1], [0], [0], [1], [0, 0, 1, 1], [], []>} : vector<64x128xf32>, vector<128x128xf32>, vector<64x128xf32> -> vector<64x128xf32>
    %7 = arith.addf %3, %6 : vector<64x128xf32>
    %c0_6 = arith.constant 0 : index
    %c0_7 = arith.constant 0 : index
    %8 = vector.load %arg8[%c0_6, %c0_7] : memref<64x128xf32, #tpu.memory_space<vmem>>, vector<64x128xf32>
    tpu.vector_store %arg8[%c0_6, %c0_7], %7 {strides = array<i32>} : memref<64x128xf32, #tpu.memory_space<vmem>>, vector<64x128xf32>,
    %c0_i32_8 = arith.constant 0 : i32
    %9 = arith.cmpi eq, %arg1, %c0_i32_8 : i32
    %10 = arith.extui %9 : i1 to i32
    %c0_i32_9 = arith.constant 0 : i32
    %11 = arith.cmpi ne, %10, %c0_i32_9 : i32
    scf.if %11 {
      %c0_10 = arith.constant 0 : index
      %c0_11 = arith.constant 0 : index
      %12 = vector.load %arg8[%c0_10, %c0_11] : memref<64x128xf32, #tpu.memory_space<vmem>>, vector<64x128xf32>
      %cst_12 = arith.constant 0.899999976 : f32
      %13 = vector.broadcast %cst_12 : f32 to vector<64x128xf32>
      %14 = arith.mulf %13, %12 : vector<64x128xf32>
      %c0_13 = arith.constant 0 : index
      %c0_14 = arith.constant 0 : index
      %15 = vector.load %arg4[%c0_13, %c0_14] : memref<64x128xf32, #tpu.memory_space<vmem>>, vector<64x128xf32>
      %cst_15 = arith.constant 1.000000e-01 : f32
      %16 = vector.broadcast %cst_15 : f32 to vector<64x128xf32>
      %17 = arith.mulf %16, %15 : vector<64x128xf32>
      %18 = arith.addf %14, %17 : vector<64x128xf32>
      %c0_16 = arith.constant 0 : index
      %c0_17 = arith.constant 0 : index
      %19 = vector.load %arg5[%c0_16, %c0_17] : memref<128x128xf32, #tpu.memory_space<vmem>>, vector<128x128xf32>
      %cst_18 = arith.constant dense<0.000000e+00> : vector<64x128xf32>
      %20 = tpu.matmul %18, %19, %cst_18 {dimension_numbers = #tpu.dot_dimension_numbers<[1], [0], [0], [1], [0, 0, 1, 1], [], []>} : vector<64x128xf32>, vector<128x128xf32>, vector<64x128xf32> -> vector<64x128xf32>
      %cst_19 = arith.constant 0.405465096 : f32
      %21 = vector.broadcast %cst_19 : f32 to vector<64x128xf32>
      %22 = arith.mulf %21, %20 : vector<64x128xf32>
      %cst_20 = arith.constant 0.594534874 : f32
      %23 = vector.broadcast %cst_20 : f32 to vector<64x128xf32>
      %24 = arith.mulf %23, %18 : vector<64x128xf32>
      %25 = arith.addf %22, %24 : vector<64x128xf32>
      %c0_21 = arith.constant 0 : index
      %c0_22 = arith.constant 0 : index
      %26 = vector.load %arg6[%c0_21, %c0_22] : memref<64x128xf32, #tpu.memory_space<vmem>>, vector<64x128xf32>
      %27 = arith.addf %25, %26 : vector<64x128xf32>
      %c0_23 = arith.constant 0 : index
      %c0_24 = arith.constant 0 : index
      %28 = vector.load %arg7[%c0_23, %c0_24] : memref<64x128xf32, #tpu.memory_space<vmem>>, vector<64x128xf32>
      tpu.vector_store %arg7[%c0_23, %c0_24], %27 {strides = array<i32>} : memref<64x128xf32, #tpu.memory_space<vmem>>, vector<64x128xf32>,
    } else {
    }
    return
  }
  func.func @transform_0(%arg0: i32, %arg1: i32) -> (i32, i32) {
    %c0_i32 = arith.constant 0 : i32
    return %arg0, %arg1 : i32, i32
  }
  func.func @transform_1(%arg0: i32, %arg1: i32) -> (i32, i32) {
    %c0_i32 = arith.constant 0 : i32
    %c0_i32_0 = arith.constant 0 : i32
    return %arg1, %c0_i32 : i32, i32
  }
  func.func @transform_2(%arg0: i32, %arg1: i32) -> (i32, i32) {
    %c0_i32 = arith.constant 0 : i32
    %c0_i32_0 = arith.constant 0 : i32
    return %arg0, %c0_i32 : i32, i32
  }
  func.func @transform_3(%arg0: i32, %arg1: i32) -> (i32, i32) {
    %c0_i32 = arith.constant 0 : i32
    %c0_i32_0 = arith.constant 0 : i32
    %c0_i32_1 = arith.constant 0 : i32
    return %c0_i32, %c0_i32_0 : i32, i32
  }
  func.func @transform_4(%arg0: i32, %arg1: i32) -> (i32, i32) {
    %c0_i32 = arith.constant 0 : i32
    %c0_i32_0 = arith.constant 0 : i32
    return %arg0, %c0_i32 : i32, i32
  }
  func.func @transform_5(%arg0: i32, %arg1: i32) -> (i32, i32) {
    %c0_i32 = arith.constant 0 : i32
    %c0_i32_0 = arith.constant 0 : i32
    return %arg0, %c0_i32 : i32, i32
  }
}

</mosaic_0001>

<llo_original>
// kernel: tpu_custom_call.1
$region0: #{tpu_custom_call.1}
  #allocation0 [shape = 'u32[]', space=smem, size = 0x4, offset = 0x4, fixed_abs, tag = 'smem constant byte address 0x4 - core index']
  #allocation1 [shape = 'u32[144,128]{1,0:T(1,128)}', space=vmem, size = 0x12000, scoped, tag = 'internal scratch']
  #allocation2 [shape = 'f32[64,128]{1,0:T(8,128)}', space=vmem, size = 0x8000, scoped, tag = 'scratch operand']
  %s0 = inlined_call_operand.hbm [shape: f32[64,128], index: 0, kind: input, shape index: {}]
  %s1 = inlined_call_operand.hbm [shape: f32[128,128], index: 1, kind: input, shape index: {}]
  %s2 = inlined_call_operand.hbm [shape: f32[64,128], index: 2, kind: input, shape index: {}]
  %s3 = inlined_call_operand.hbm [shape: f32[128,128], index: 3, kind: input, shape index: {}]
  %s4 = inlined_call_operand.hbm [shape: f32[64,128], index: 4, kind: input, shape index: {}]
  %s5 = inlined_call_operand.hbm [shape: f32[64,128], index: 5, kind: output, shape index: {}]
  %s6 = sld [smem:[#allocation0]]
  $region58: #{tpu_custom_call.1} parent=0
    _
  %s8 = ssub.s32 1, %s6
  %s9 = scalar_select 0, %s8, %s6
  $region1: #{tpu_custom_call.1} parent=0
    #allocation3 [shape = 'u8[32768]{0}', space=vmem, size = 0x8000, scoped, tag = 'input window, operand 0, single buffered']
    #allocation4 [shape = 's32[1]{0}', space=sflag, size = 0x4, scoped, tag = 'scoped memory for tpu_custom_call.1']
    #allocation5 [shape = 's32[1]{0}', space=sflag, size = 0x4, scoped, tag = 'scoped memory for tpu_custom_call.1']
    #allocation6 [shape = 'u8[65536]{0}', space=vmem, size = 0x10000, scoped, tag = 'input window, operand 1, single buffered']
    #allocation7 [shape = 's32[1]{0}', space=sflag, size = 0x4, scoped, tag = 'scoped memory for tpu_custom_call.1']
    #allocation8 [shape = 'u8[32768]{0}', space=vmem, size = 0x8000, scoped, tag = 'input window, operand 2, single buffered']
    #allocation9 [shape = 'u8[65536]{0}', space=vmem, size = 0x10000, scoped, tag = 'input window, operand 3, single buffered']
    #allocation10 [shape = 's32[1]{0}', space=sflag, size = 0x4, scoped, tag = 'scoped memory for tpu_custom_call.1']
    #allocation11 [shape = 'u8[32768]{0}', space=vmem, size = 0x8000, scoped, tag = 'input window, operand 4, single buffered']
    #allocation12 [shape = 'u8[32768]{0}', space=vmem, size = 0x8000, scoped, tag = 'output window, operand 0, single buffered']
    %10 = vsyncpa [#allocation4], 0
    %11 = vsyncpa [#allocation7], 0
    %12 = vsyncpa [#allocation10], 0
    %13 = vsyncpa [#allocation5], 0
    // Predicated region
    $region2: #{tpu_custom_call.1} parent=1 // pred_check
      _
    $region3: #{tpu_custom_call.1} parent=1 // pred_check_branch
      %15 = sbr.rel (0) target = $region5
    $region4: #{tpu_custom_call.1} parent=1 // pred_region
      %s17 = ssub.s32 1024, 1024
      %18 = vsyncadd [#allocation4], %s17
      %s19 = sshll.u32 [#allocation3], 4
      %s20 = int_to_ptr.vmem [resolvable:$true] %s19
      %25 = dma.hbm_to_vmem [thread:$0]  %s0, 1024, %s20, [#allocation4], 128, 128, 8
    $region5: #{tpu_custom_call.1} parent=1 // pred_fallthru
      _
    // Predicated region
    $region6: #{tpu_custom_call.1} parent=1 // pred_check
      _
    $region7: #{tpu_custom_call.1} parent=1 // pred_check_branch
      %27 = sbr.rel (0) target = $region9
    $region8: #{tpu_custom_call.1} parent=1 // pred_region
      %s29 = ssub.s32 2048, 2048
      %30 = vsyncadd [#allocation7], %s29
      %s31 = sshll.u32 [#allocation6], 4
      %s32 = int_to_ptr.vmem [resolvable:$true] %s31
      %37 = dma.hbm_to_vmem [thread:$0]  %s1, 2048, %s32, [#allocation7], 128, 128, 8
    $region9: #{tpu_custom_call.1} parent=1 // pred_fallthru
      _
    // Predicated region
    $region10: #{tpu_custom_call.1} parent=1 // pred_check
      _
    $region11: #{tpu_custom_call.1} parent=1 // pred_check_branch
      %39 = sbr.rel (0) target = $region13
    $region12: #{tpu_custom_call.1} parent=1 // pred_region
      %s41 = ssub.s32 1024, 1024
      %42 = vsyncadd [#allocation7], %s41
      %s43 = sshll.u32 [#allocation8], 4
      %s44 = int_to_ptr.vmem [resolvable:$true] %s43
      %49 = dma.hbm_to_vmem [thread:$0]  %s2, 1024, %s44, [#allocation7], 128, 128, 8
    $region13: #{tpu_custom_call.1} parent=1 // pred_fallthru
      _
    // Predicated region
    $region14: #{tpu_custom_call.1} parent=1 // pred_check
      _
    $region15: #{tpu_custom_call.1} parent=1 // pred_check_branch
      %51 = sbr.rel (0) target = $region17
    $region16: #{tpu_custom_call.1} parent=1 // pred_region
      %s53 = ssub.s32 2048, 2048
      %54 = vsyncadd [#allocation10], %s53
      %s55 = sshll.u32 [#allocation9], 4
      %s56 = int_to_ptr.vmem [resolvable:$true] %s55
      %61 = dma.hbm_to_vmem [thread:$0]  %s3, 2048, %s56, [#allocation10], 128, 128, 8
    $region17: #{tpu_custom_call.1} parent=1 // pred_fallthru
      _
    // Predicated region
    $region18: #{tpu_custom_call.1} parent=1 // pred_check
      _
    $region19: #{tpu_custom_call.1} parent=1 // pred_check_branch
      %63 = sbr.rel (0) target = $region21
    $region20: #{tpu_custom_call.1} parent=1 // pred_region
      %s65 = ssub.s32 1024, 1024
      %66 = vsyncadd [#allocation10], %s65
      %s67 = sshll.u32 [#allocation11], 4
      %s68 = int_to_ptr.vmem [resolvable:$true] %s67
      %73 = dma.hbm_to_vmem [thread:$0]  %s4, 1024, %s68, [#allocation10], 128, 128, 8
    $region21: #{tpu_custom_call.1} parent=1 // pred_fallthru
      _
    // Predicated region
    $region22: #{tpu_custom_call.1} parent=1 // pred_check
      _
    $region23: #{tpu_custom_call.1} parent=1 // pred_check_branch
      %75 = sbr.rel (0) target = $region25
    $region24: #{tpu_custom_call.1} parent=1 // pred_region
      %76 = dma.done [#allocation4], 1024
    $region25: #{tpu_custom_call.1} parent=1 // pred_fallthru
      _
    // Predicated region
    $region26: #{tpu_custom_call.1} parent=1 // pred_check
      _
    $region27: #{tpu_custom_call.1} parent=1 // pred_check_branch
      %78 = sbr.rel (0) target = $region29
    $region28: #{tpu_custom_call.1} parent=1 // pred_region
      %79 = dma.done [#allocation7], 2048
    $region29: #{tpu_custom_call.1} parent=1 // pred_fallthru
      _
    // Predicated region
    $region30: #{tpu_custom_call.1} parent=1 // pred_check
      _
    $region31: #{tpu_custom_call.1} parent=1 // pred_check_branch
      %81 = sbr.rel (0) target = $region33
    $region32: #{tpu_custom_call.1} parent=1 // pred_region
      %82 = dma.done [#allocation7], 1024
    $region33: #{tpu_custom_call.1} parent=1 // pred_fallthru
      _
    // Predicated region
    $region34: #{tpu_custom_call.1} parent=1 // pred_check
      _
    $region35: #{tpu_custom_call.1} parent=1 // pred_check_branch
      %84 = sbr.rel (0) target = $region37
    $region36: #{tpu_custom_call.1} parent=1 // pred_region
      %85 = dma.done [#allocation10], 2048
    $region37: #{tpu_custom_call.1} parent=1 // pred_fallthru
      _
    // Predicated region
    $region38: #{tpu_custom_call.1} parent=1 // pred_check
      _
    $region39: #{tpu_custom_call.1} parent=1 // pred_check_branch
      %87 = sbr.rel (0) target = $region41
    $region40: #{tpu_custom_call.1} parent=1 // pred_region
      %88 = dma.done [#allocation10], 1024
    $region41: #{tpu_custom_call.1} parent=1 // pred_fallthru
      _
    %p89 = scmp.eq.s32.totalorder 0, 0
    // Predicated region
    $region42: #{tpu_custom_call.1} parent=1 // pred_check
      %p90 = pneg %p89
    $region43: #{tpu_custom_call.1} parent=1 // pred_check_branch
      %92 = sbr.rel (%p90) target = $region45
    $region44: #{tpu_custom_call.1} parent=1 // pred_region
      %93 = vst [vmem:[#allocation2] sm:$0xff] 0.0
      %94 = vst [vmem:[#allocation2 + $0x8] sm:$0xff] 0.0
      %95 = vst [vmem:[#allocation2 + $0x10] sm:$0xff] 0.0
      %96 = vst [vmem:[#allocation2 + $0x18] sm:$0xff] 0.0
      %97 = vst [vmem:[#allocation2 + $0x20] sm:$0xff] 0.0
      %98 = vst [vmem:[#allocation2 + $0x28] sm:$0xff] 0.0
      %99 = vst [vmem:[#allocation2 + $0x30] sm:$0xff] 0.0
      %100 = vst [vmem:[#allocation2 + $0x38] sm:$0xff] 0.0
    $region45: #{tpu_custom_call.1} parent=1 // pred_fallthru
      _
    %v101 = vld [vmem:[#allocation2] sm:$0xff]
    %v102 = vld [vmem:[#allocation2 + $0x8] sm:$0xff]
    %v103 = vld [vmem:[#allocation2 + $0x10] sm:$0xff]
    %v104 = vld [vmem:[#allocation2 + $0x18] sm:$0xff]
    %v105 = vld [vmem:[#allocation2 + $0x20] sm:$0xff]
    %v106 = vld [vmem:[#allocation2 + $0x28] sm:$0xff]
    %v107 = vld [vmem:[#allocation2 + $0x30] sm:$0xff]
    %v108 = vld [vmem:[#allocation2 + $0x38] sm:$0xff]
    %v109 = vld [vmem:[#allocation3] sm:$0xff]
    %v110 = vld [vmem:[#allocation3 + $0x8] sm:$0xff]
    %v111 = vld [vmem:[#allocation3 + $0x10] sm:$0xff]
    %v112 = vld [vmem:[#allocation3 + $0x18] sm:$0xff]
    %v113 = vld [vmem:[#allocation3 + $0x20] sm:$0xff]
    %v114 = vld [vmem:[#allocation3 + $0x28] sm:$0xff]
    %v115 = vld [vmem:[#allocation3 + $0x30] sm:$0xff]
    %v116 = vld [vmem:[#allocation3 + $0x38] sm:$0xff]
    %v117 = vld [vmem:[#allocation6] sm:$0xff]
    %v118 = vld [vmem:[#allocation6 + $0x8] sm:$0xff]
    %v119 = vld [vmem:[#allocation6 + $0x10] sm:$0xff]
    %v120 = vld [vmem:[#allocation6 + $0x18] sm:$0xff]
    %v121 = vld [vmem:[#allocation6 + $0x20] sm:$0xff]
    %v122 = vld [vmem:[#allocation6 + $0x28] sm:$0xff]
    %v123 = vld [vmem:[#allocation6 + $0x30] sm:$0xff]
    %v124 = vld [vmem:[#allocation6 + $0x38] sm:$0xff]
    %v125 = vld [vmem:[#allocation6 + $0x40] sm:$0xff]
    %v126 = vld [vmem:[#allocation6 + $0x48] sm:$0xff]
    %v127 = vld [vmem:[#allocation6 + $0x50] sm:$0xff]
    %v128 = vld [vmem:[#allocation6 + $0x58] sm:$0xff]
    %v129 = vld [vmem:[#allocation6 + $0x60] sm:$0xff]
    %v130 = vld [vmem:[#allocation6 + $0x68] sm:$0xff]
    %v131 = vld [vmem:[#allocation6 + $0x70] sm:$0xff]
    %v132 = vld [vmem:[#allocation6 + $0x78] sm:$0xff]
    %133 = vmatprep.subr.mxu0 0.0
    %134 = vmatpush1.msra.mxu0 %v117
    %135 = vmatprep.subr.mxu0 0.0
    %136 = vmatpush1.msra.mxu0 %v118
    %137 = vmatprep.subr.mxu0 0.0
    %138 = vmatpush1.msra.mxu0 %v119
    %139 = vmatprep.subr.mxu0 0.0
    %140 = vmatpush1.msra.mxu0 %v120
    %141 = vmatprep.subr.mxu0 0.0
    %142 = vmatpush1.msra.mxu0 %v121
    %143 = vmatprep.subr.mxu0 0.0
    %144 = vmatpush1.msra.mxu0 %v122
    %145 = vmatprep.subr.mxu0 0.0
    %146 = vmatpush1.msra.mxu0 %v123
    %147 = vmatprep.subr.mxu0 0.0
    %148 = vmatpush1.msra.mxu0 %v124
    %149 = vmatprep.subr.mxu0 0.0
    %150 = vmatpush1.msra.mxu0 %v125
    %151 = vmatprep.subr.mxu0 0.0
    %152 = vmatpush1.msra.mxu0 %v126
    %153 = vmatprep.subr.mxu0 0.0
    %154 = vmatpush1.msra.mxu0 %v127
    %155 = vmatprep.subr.mxu0 0.0
    %156 = vmatpush1.msra.mxu0 %v128
    %157 = vmatprep.subr.mxu0 0.0
    %158 = vmatpush1.msra.mxu0 %v129
    %159 = vmatprep.subr.mxu0 0.0
    %160 = vmatpush1.msra.mxu0 %v130
    %161 = vmatprep.subr.mxu0 0.0
    %162 = vmatpush1.msra.mxu0 %v131
    %163 = vmatprep.subr.mxu0 0.0
    %164 = vmatpush1.msra.mxu0 %v132
    %165 = vmatprep.subr.mxu0 0.0
    %166 = vmatpush1.msra.mxu0 0.0
    %167 = vmatprep.subr.mxu0 0.0
    %168 = vmatpush1.msra.mxu0 0.0
    %169 = vmatprep.subr.mxu0 0.0
    %170 = vmatpush1.msra.mxu0 0.0
    %171 = vmatprep.subr.mxu0 0.0
    %172 = vmatpush1.msra.mxu0 0.0
    %173 = vmatprep.subr.mxu0 0.0
    %174 = vmatpush1.msra.mxu0 0.0
    %175 = vmatprep.subr.mxu0 0.0
    %176 = vmatpush1.msra.mxu0 0.0
    %177 = vmatprep.subr.mxu0 0.0
    %178 = vmatpush1.msra.mxu0 0.0
    %179 = vmatprep.subr.mxu0 0.0
    %180 = vmatpush1.msra.mxu0 0.0
    %181 = vmatprep.subr.mxu0 0.0
    %182 = vmatpush1.msra.mxu0 0.0
    %183 = vmatprep.subr.mxu0 0.0
    %184 = vmatpush1.msra.mxu0 0.0
    %185 = vmatprep.subr.mxu0 0.0
    %186 = vmatpush1.msra.mxu0 0.0
    %187 = vmatprep.subr.mxu0 0.0
    %188 = vmatpush1.msra.mxu0 0.0
    %189 = vmatprep.subr.mxu0 0.0
    %190 = vmatpush1.msra.mxu0 0.0
    %191 = vmatprep.subr.mxu0 0.0
    %192 = vmatpush1.msra.mxu0 0.0
    %193 = vmatprep.subr.mxu0 0.0
    %194 = vmatpush1.msra.mxu0 0.0
    %195 = vmatprep.subr.mxu0 0.0
    %196 = vmatpush1.msra.mxu0 0.0
    %197 = vmatprep.mubr.f32.mxu0 0.0
    %198 = vmatmul.mubr.f32.gmra.mrb[0].mxu0 %v109
    %v199 = vpop.f32.mrb[0].mxu0
    %v200 = vadd.f32 0.0, %v199
    %v201 = vpop.f32.mrb[0].mxu0
    %202 = vmatprep.mubr.f32.mxu0 0.0
    %203 = vmatmul.mubr.f32.gmra.mrb[0].mxu0 %v110
    %v204 = vpop.f32.mrb[0].mxu0
    %v205 = vadd.f32 0.0, %v204
    %v206 = vpop.f32.mrb[0].mxu0
    %207 = vmatprep.mubr.f32.mxu0 0.0
    %208 = vmatmul.mubr.f32.gmra.mrb[0].mxu0 %v111
    %v209 = vpop.f32.mrb[0].mxu0
    %v210 = vadd.f32 0.0, %v209
    %v211 = vpop.f32.mrb[0].mxu0
    %212 = vmatprep.mubr.f32.mxu0 0.0
    %213 = vmatmul.mubr.f32.gmra.mrb[0].mxu0 %v112
    %v214 = vpop.f32.mrb[0].mxu0
    %v215 = vadd.f32 0.0, %v214
    %v216 = vpop.f32.mrb[0].mxu0
    %217 = vmatprep.mubr.f32.mxu0 0.0
    %218 = vmatmul.mubr.f32.gmra.mrb[0].mxu0 %v113
    %v219 = vpop.f32.mrb[0].mxu0
    %v220 = vadd.f32 0.0, %v219
    %v221 = vpop.f32.mrb[0].mxu0
    %222 = vmatprep.mubr.f32.mxu0 0.0
    %223 = vmatmul.mubr.f32.gmra.mrb[0].mxu0 %v114
    %v224 = vpop.f32.mrb[0].mxu0
    %v225 = vadd.f32 0.0, %v224
    %v226 = vpop.f32.mrb[0].mxu0
    %227 = vmatprep.mubr.f32.mxu0 0.0
    %228 = vmatmul.mubr.f32.gmra.mrb[0].mxu0 %v115
    %v229 = vpop.f32.mrb[0].mxu0
    %v230 = vadd.f32 0.0, %v229
    %v231 = vpop.f32.mrb[0].mxu0
    %232 = vmatprep.mubr.f32.mxu0 0.0
    %233 = vmatmul.mubr.f32.gmra.mrb[0].mxu0 %v116
    %v234 = vpop.f32.mrb[0].mxu0
    %v235 = vadd.f32 0.0, %v234
    %v236 = vpop.f32.mrb[0].mxu0
    %237 = vdwg.mxu0
    %v238 = vadd.f32 %v101, %v200
    %v239 = vadd.f32 %v102, %v205
    %v240 = vadd.f32 %v103, %v210
    %v241 = vadd.f32 %v104, %v215
    %v242 = vadd.f32 %v105, %v220
    %v243 = vadd.f32 %v106, %v225
    %v244 = vadd.f32 %v107, %v230
    %v245 = vadd.f32 %v108, %v235
    %246 = vst [vmem:[#allocation2] sm:$0xff] %v238
    %247 = vst [vmem:[#allocation2 + $0x8] sm:$0xff] %v239
    %248 = vst [vmem:[#allocation2 + $0x10] sm:$0xff] %v240
    %249 = vst [vmem:[#allocation2 + $0x18] sm:$0xff] %v241
    %250 = vst [vmem:[#allocation2 + $0x20] sm:$0xff] %v242
    %251 = vst [vmem:[#allocation2 + $0x28] sm:$0xff] %v243
    %252 = vst [vmem:[#allocation2 + $0x30] sm:$0xff] %v244
    %253 = vst [vmem:[#allocation2 + $0x38] sm:$0xff] %v245
    // Predicated region
    $region46: #{tpu_custom_call.1} parent=1 // pred_check
      %p254 = pneg %p89
    $region47: #{tpu_custom_call.1} parent=1 // pred_check_branch
      %256 = sbr.rel (%p254) target = $region49
    $region48: #{tpu_custom_call.1} parent=1 // pred_region
      %v257 = vld [vmem:[#allocation2] sm:$0xff]
      %v258 = vld [vmem:[#allocation2 + $0x8] sm:$0xff]
      %v259 = vld [vmem:[#allocation2 + $0x10] sm:$0xff]
      %v260 = vld [vmem:[#allocation2 + $0x18] sm:$0xff]
      %v261 = vld [vmem:[#allocation2 + $0x20] sm:$0xff]
      %v262 = vld [vmem:[#allocation2 + $0x28] sm:$0xff]
      %v263 = vld [vmem:[#allocation2 + $0x30] sm:$0xff]
      %v264 = vld [vmem:[#allocation2 + $0x38] sm:$0xff]
      %v265 = vmul.f32 %v257, 0.9
      %v266 = vmul.f32 %v258, 0.9
      %v267 = vmul.f32 %v259, 0.9
      %v268 = vmul.f32 %v260, 0.9
      %v269 = vmul.f32 %v261, 0.9
      %v270 = vmul.f32 %v262, 0.9
      %v271 = vmul.f32 %v263, 0.9
      %v272 = vmul.f32 %v264, 0.9
      %v273 = vld [vmem:[#allocation8] sm:$0xff]
      %v274 = vld [vmem:[#allocation8 + $0x8] sm:$0xff]
      %v275 = vld [vmem:[#allocation8 + $0x10] sm:$0xff]
      %v276 = vld [vmem:[#allocation8 + $0x18] sm:$0xff]
      %v277 = vld [vmem:[#allocation8 + $0x20] sm:$0xff]
      %v278 = vld [vmem:[#allocation8 + $0x28] sm:$0xff]
      %v279 = vld [vmem:[#allocation8 + $0x30] sm:$0xff]
      %v280 = vld [vmem:[#allocation8 + $0x38] sm:$0xff]
      %v281 = vmul.f32 %v273, 0.1
      %v282 = vmul.f32 %v274, 0.1
      %v283 = vmul.f32 %v275, 0.1
      %v284 = vmul.f32 %v276, 0.1
      %v285 = vmul.f32 %v277, 0.1
      %v286 = vmul.f32 %v278, 0.1
      %v287 = vmul.f32 %v279, 0.1
      %v288 = vmul.f32 %v280, 0.1
      %v289 = vadd.f32 %v265, %v281
      %v290 = vadd.f32 %v266, %v282
      %v291 = vadd.f32 %v267, %v283
      %v292 = vadd.f32 %v268, %v284
      %v293 = vadd.f32 %v269, %v285
      %v294 = vadd.f32 %v270, %v286
      %v295 = vadd.f32 %v271, %v287
      %v296 = vadd.f32 %v272, %v288
      %v297 = vld [vmem:[#allocation9] sm:$0xff]
      %v298 = vld [vmem:[#allocation9 + $0x8] sm:$0xff]
      %v299 = vld [vmem:[#allocation9 + $0x10] sm:$0xff]
      %v300 = vld [vmem:[#allocation9 + $0x18] sm:$0xff]
      %v301 = vld [vmem:[#allocation9 + $0x20] sm:$0xff]
      %v302 = vld [vmem:[#allocation9 + $0x28] sm:$0xff]
      %v303 = vld [vmem:[#allocation9 + $0x30] sm:$0xff]
      %v304 = vld [vmem:[#allocation9 + $0x38] sm:$0xff]
      %v305 = vld [vmem:[#allocation9 + $0x40] sm:$0xff]
      %v306 = vld [vmem:[#allocation9 + $0x48] sm:$0xff]
      %v307 = vld [vmem:[#allocation9 + $0x50] sm:$0xff]
      %v308 = vld [vmem:[#allocation9 + $0x58] sm:$0xff]
      %v309 = vld [vmem:[#allocation9 + $0x60] sm:$0xff]
      %v310 = vld [vmem:[#allocation9 + $0x68] sm:$0xff]
      %v311 = vld [vmem:[#allocation9 + $0x70] sm:$0xff]
      %v312 = vld [vmem:[#allocation9 + $0x78] sm:$0xff]
      %313 = vmatprep.subr.mxu0 0.0
      %314 = vmatpush1.msra.mxu0 %v297
      %315 = vmatprep.subr.mxu0 0.0
      %316 = vmatpush1.msra.mxu0 %v298
      %317 = vmatprep.subr.mxu0 0.0
      %318 = vmatpush1.msra.mxu0 %v299
      %319 = vmatprep.subr.mxu0 0.0
      %320 = vmatpush1.msra.mxu0 %v300
      %321 = vmatprep.subr.mxu0 0.0
      %322 = vmatpush1.msra.mxu0 %v301
      %323 = vmatprep.subr.mxu0 0.0
      %324 = vmatpush1.msra.mxu0 %v302
      %325 = vmatprep.subr.mxu0 0.0
      %326 = vmatpush1.msra.mxu0 %v303
      %327 = vmatprep.subr.mxu0 0.0
      %328 = vmatpush1.msra.mxu0 %v304
      %329 = vmatprep.subr.mxu0 0.0
      %330 = vmatpush1.msra.mxu0 %v305
      %331 = vmatprep.subr.mxu0 0.0
      %332 = vmatpush1.msra.mxu0 %v306
      %333 = vmatprep.subr.mxu0 0.0
      %334 = vmatpush1.msra.mxu0 %v307
      %335 = vmatprep.subr.mxu0 0.0
      %336 = vmatpush1.msra.mxu0 %v308
      %337 = vmatprep.subr.mxu0 0.0
      %338 = vmatpush1.msra.mxu0 %v309
      %339 = vmatprep.subr.mxu0 0.0
      %340 = vmatpush1.msra.mxu0 %v310
      %341 = vmatprep.subr.mxu0 0.0
      %342 = vmatpush1.msra.mxu0 %v311
      %343 = vmatprep.subr.mxu0 0.0
      %344 = vmatpush1.msra.mxu0 %v312
      %345 = vmatprep.subr.mxu0 0.0
      %346 = vmatpush1.msra.mxu0 0.0
      %347 = vmatprep.subr.mxu0 0.0
      %348 = vmatpush1.msra.mxu0 0.0
      %349 = vmatprep.subr.mxu0 0.0
      %350 = vmatpush1.msra.mxu0 0.0
      %351 = vmatprep.subr.mxu0 0.0
      %352 = vmatpush1.msra.mxu0 0.0
      %353 = vmatprep.subr.mxu0 0.0
      %354 = vmatpush1.msra.mxu0 0.0
      %355 = vmatprep.subr.mxu0 0.0
      %356 = vmatpush1.msra.mxu0 0.0
      %357 = vmatprep.subr.mxu0 0.0
      %358 = vmatpush1.msra.mxu0 0.0
      %359 = vmatprep.subr.mxu0 0.0
      %360 = vmatpush1.msra.mxu0 0.0
      %361 = vmatprep.subr.mxu0 0.0
      %362 = vmatpush1.msra.mxu0 0.0
      %363 = vmatprep.subr.mxu0 0.0
      %364 = vmatpush1.msra.mxu0 0.0
      %365 = vmatprep.subr.mxu0 0.0
      %366 = vmatpush1.msra.mxu0 0.0
      %367 = vmatprep.subr.mxu0 0.0
      %368 = vmatpush1.msra.mxu0 0.0
      %369 = vmatprep.subr.mxu0 0.0
      %370 = vmatpush1.msra.mxu0 0.0
      %371 = vmatprep.subr.mxu0 0.0
      %372 = vmatpush1.msra.mxu0 0.0
      %373 = vmatprep.subr.mxu0 0.0
      %374 = vmatpush1.msra.mxu0 0.0
      %375 = vmatprep.subr.mxu0 0.0
      %376 = vmatpush1.msra.mxu0 0.0
      %377 = vmatprep.mubr.f32.mxu0 0.0
      %378 = vmatmul.mubr.f32.gmra.mrb[0].mxu0 %v289
      %v379 = vpop.f32.mrb[0].mxu0
      %v380 = vadd.f32 0.0, %v379
      %v381 = vpop.f32.mrb[0].mxu0
      %382 = vmatprep.mubr.f32.mxu0 0.0
      %383 = vmatmul.mubr.f32.gmra.mrb[0].mxu0 %v290
      %v384 = vpop.f32.mrb[0].mxu0
      %v385 = vadd.f32 0.0, %v384
      %v386 = vpop.f32.mrb[0].mxu0
      %387 = vmatprep.mubr.f32.mxu0 0.0
      %388 = vmatmul.mubr.f32.gmra.mrb[0].mxu0 %v291
      %v389 = vpop.f32.mrb[0].mxu0
      %v390 = vadd.f32 0.0, %v389
      %v391 = vpop.f32.mrb[0].mxu0
      %392 = vmatprep.mubr.f32.mxu0 0.0
      %393 = vmatmul.mubr.f32.gmra.mrb[0].mxu0 %v292
      %v394 = vpop.f32.mrb[0].mxu0
      %v395 = vadd.f32 0.0, %v394
      %v396 = vpop.f32.mrb[0].mxu0
      %397 = vmatprep.mubr.f32.mxu0 0.0
      %398 = vmatmul.mubr.f32.gmra.mrb[0].mxu0 %v293
      %v399 = vpop.f32.mrb[0].mxu0
      %v400 = vadd.f32 0.0, %v399
      %v401 = vpop.f32.mrb[0].mxu0
      %402 = vmatprep.mubr.f32.mxu0 0.0
      %403 = vmatmul.mubr.f32.gmra.mrb[0].mxu0 %v294
      %v404 = vpop.f32.mrb[0].mxu0
      %v405 = vadd.f32 0.0, %v404
      %v406 = vpop.f32.mrb[0].mxu0
      %407 = vmatprep.mubr.f32.mxu0 0.0
      %408 = vmatmul.mubr.f32.gmra.mrb[0].mxu0 %v295
      %v409 = vpop.f32.mrb[0].mxu0
      %v410 = vadd.f32 0.0, %v409
      %v411 = vpop.f32.mrb[0].mxu0
      %412 = vmatprep.mubr.f32.mxu0 0.0
      %413 = vmatmul.mubr.f32.gmra.mrb[0].mxu0 %v296
      %v414 = vpop.f32.mrb[0].mxu0
      %v415 = vadd.f32 0.0, %v414
      %v416 = vpop.f32.mrb[0].mxu0
      %417 = vdwg.mxu0
      %v418 = vmul.f32 %v380, 0.4054651
      %v419 = vmul.f32 %v385, 0.4054651
      %v420 = vmul.f32 %v390, 0.4054651
      %v421 = vmul.f32 %v395, 0.4054651
      %v422 = vmul.f32 %v400, 0.4054651
      %v423 = vmul.f32 %v405, 0.4054651
      %v424 = vmul.f32 %v410, 0.4054651
      %v425 = vmul.f32 %v415, 0.4054651
      %v426 = vmul.f32 %v289, 0.5945349
      %v427 = vmul.f32 %v290, 0.5945349
      %v428 = vmul.f32 %v291, 0.5945349
      %v429 = vmul.f32 %v292, 0.5945349
      %v430 = vmul.f32 %v293, 0.5945349
      %v431 = vmul.f32 %v294, 0.5945349
      %v432 = vmul.f32 %v295, 0.5945349
      %v433 = vmul.f32 %v296, 0.5945349
      %v434 = vadd.f32 %v418, %v426
      %v435 = vadd.f32 %v419, %v427
      %v436 = vadd.f32 %v420, %v428
      %v437 = vadd.f32 %v421, %v429
      %v438 = vadd.f32 %v422, %v430
      %v439 = vadd.f32 %v423, %v431
      %v440 = vadd.f32 %v424, %v432
      %v441 = vadd.f32 %v425, %v433
      %v442 = vld [vmem:[#allocation11] sm:$0xff]
      %v443 = vld [vmem:[#allocation11 + $0x8] sm:$0xff]
      %v444 = vld [vmem:[#allocation11 + $0x10] sm:$0xff]
      %v445 = vld [vmem:[#allocation11 + $0x18] sm:$0xff]
      %v446 = vld [vmem:[#allocation11 + $0x20] sm:$0xff]
      %v447 = vld [vmem:[#allocation11 + $0x28] sm:$0xff]
      %v448 = vld [vmem:[#allocation11 + $0x30] sm:$0xff]
      %v449 = vld [vmem:[#allocation11 + $0x38] sm:$0xff]
      %v450 = vadd.f32 %v434, %v442
      %v451 = vadd.f32 %v435, %v443
      %v452 = vadd.f32 %v436, %v444
      %v453 = vadd.f32 %v437, %v445
      %v454 = vadd.f32 %v438, %v446
      %v455 = vadd.f32 %v439, %v447
      %v456 = vadd.f32 %v440, %v448
      %v457 = vadd.f32 %v441, %v449
      %458 = vst [vmem:[#allocation12] sm:$0xff] %v450
      %459 = vst [vmem:[#allocation12 + $0x8] sm:$0xff] %v451
      %460 = vst [vmem:[#allocation12 + $0x10] sm:$0xff] %v452
      %461 = vst [vmem:[#allocation12 + $0x18] sm:$0xff] %v453
      %462 = vst [vmem:[#allocation12 + $0x20] sm:$0xff] %v454
      %463 = vst [vmem:[#allocation12 + $0x28] sm:$0xff] %v455
      %464 = vst [vmem:[#allocation12 + $0x30] sm:$0xff] %v456
      %465 = vst [vmem:[#allocation12 + $0x38] sm:$0xff] %v457
    $region49: #{tpu_custom_call.1} parent=1 // pred_fallthru
      _
    // Predicated region
    $region50: #{tpu_custom_call.1} parent=1 // pred_check
      _
    $region51: #{tpu_custom_call.1} parent=1 // pred_check_branch
      %467 = sbr.rel (0) target = $region53
    $region52: #{tpu_custom_call.1} parent=1 // pred_region
      %s469 = ssub.s32 1024, 1024
      %470 = vsyncadd [#allocation5], %s469
      %s471 = sshll.u32 [#allocation12], 4
      %s472 = int_to_ptr.vmem [resolvable:$true] %s471
      %477 = dma.vmem_to_hbm [thread:$0]  %s472, 1024, %s5, [#allocation5], 128, 128, 8
    $region53: #{tpu_custom_call.1} parent=1 // pred_fallthru
      _
    // Predicated region
    $region54: #{tpu_custom_call.1} parent=1 // pred_check
      _
    $region55: #{tpu_custom_call.1} parent=1 // pred_check_branch
      %479 = sbr.rel (0) target = $region57
    $region56: #{tpu_custom_call.1} parent=1 // pred_region
      %480 = dma.done [#allocation5], 1024
    $region57: #{tpu_custom_call.1} parent=1 // pred_fallthru
      _
    %481 = vsyncpa [#allocation4], 1
    %482 = vsyncpa [#allocation7], 1
    %483 = vsyncpa [#allocation10], 1
    %484 = vsyncpa [#allocation5], 1

</llo_original>
